<compile_context>
chip_gen: v7x
topology: tpu7x:2x2x1
jax: 0.10.0
libtpu: 0.0.40
codegen_flags: <defaults>
</compile_context>

<pallas_src>
import math
from functools import partial

import jax
import jax.numpy as jnp
from jax.experimental import pallas as pl
from jax.experimental.pallas import tpu as pltpu


def _round_up(x, m):
    return (x + m - 1) // m * m


# ----------------------------- Pallas kernels -----------------------------

def _inv_norm_kernel(x_ref, o_ref):
    # o = 1 / max(||row||_2, 1e-12)   (matches F.normalize(p=2, dim=1, eps=1e-12))
    x = x_ref[...].astype(jnp.float32)
    sq = jnp.sum(x * x, axis=1, keepdims=True)
    o_ref[...] = 1.0 / jnp.maximum(jnp.sqrt(sq), 1e-12)


def _arc_margin_kernel(x_ref, w_ref, xinv_ref, winv_ref, lbl_ref, col_ref,
                       o_ref, acc_ref,
                       *, cos_m, sin_m, th, mm, s, easy_margin, nk):
    # x_ref: (tm, tk) bf16   w_ref: (tn, tk) bf16 (row-major PyTorch weight)
    # xinv_ref: (tm, 1) f32  winv_ref: (1, tn) f32
    # lbl_ref: (tm, 1) i32   col_ref: (1, tn) i32 (absolute class indices)
    k = pl.program_id(2)

    @pl.when(k == 0)
    def _():
        acc_ref[...] = jnp.zeros_like(acc_ref)

    # (tm, tk) x (tn, tk)^T -> (tm, tn), f32 accumulation on the MXU.
    acc_ref[...] += jax.lax.dot_general(
        x_ref[...], w_ref[...],
        dimension_numbers=(((1,), (1,)), ((), ())),
        preferred_element_type=jnp.float32)

    @pl.when(k == nk - 1)
    def _():
        cosine = acc_ref[...] * xinv_ref[...] * winv_ref[...]
        cosine = jnp.clip(cosine, -1.0, 1.0)
        sine = jnp.sqrt(1.0 - cosine * cosine + 1e-7)
        phi = cosine * cos_m - sine * sin_m
        if easy_margin:
            phi = jnp.where(cosine > 0.0, phi, cosine)
        else:
            phi = jnp.where(cosine > th, phi, cosine - mm)
        # one_hot.scatter_(1, label, 1) -> select phi on the label column.
        is_target = col_ref[...] == lbl_ref[...]          # (1,tn) vs (tm,1) -> (tm,tn)
        o_ref[...] = (jnp.where(is_target, phi, cosine) * s).astype(o_ref.dtype)


# ------------------------------- wrappers ----------------------------------

def _inv_row_norms(mat, row_tile):
    """mat: (R, C) f32 (already padded; R % row_tile == 0) -> (R, 1) f32 = 1/||row||."""
    R, C = mat.shape
    return pl.pallas_call(
        _inv_norm_kernel,
        out_shape=jax.ShapeDtypeStruct((R, 1), jnp.float32),
        grid_spec=pltpu.PrefetchScalarGridSpec(
            num_scalar_prefetch=0, grid=(R // row_tile,),
            in_specs=[pl.BlockSpec((row_tile, C), lambda i: (i, 0))],
            out_specs=pl.BlockSpec((row_tile, 1), lambda i: (i, 0))),
        compiler_params=pltpu.CompilerParams(dimension_semantics=("parallel",)),
    )(mat)


def arc_margin_product(x, weight, label, *, s=30.0, m=0.5, easy_margin=False,
                       tm=None, tn=None, tk=None):
    """Pallas ArcMarginProduct.forward.

    x: (B, in_features), weight: (out_features, in_features), label: (B,) int.
    Returns (B, out_features) float32.
    """
    M, K = x.shape
    N, K2 = weight.shape
    assert K == K2, "weight / input feature-dim mismatch"

    # Default tiles: 256-multiples on N/K (v6e/v7x 256x256 MXU; still fine as
    # 2x128 on v5e), clamped to the padded problem size. Lane-dense output.
    if tm is None:
        tm = min(256, _round_up(M, 8))
    if tn is None:
        tn = min(256, _round_up(N, 128))
    if tk is None:
        tk = min(512, _round_up(K, 128))

    Mp, Np, Kp = _round_up(M, tm), _round_up(N, tn), _round_up(K, tk)

    xf = x.astype(jnp.float32)
    wf = weight.astype(jnp.float32)
    xp = jnp.pad(xf, ((0, Mp - M), (0, Kp - K)))          # (Mp, Kp)
    wp = jnp.pad(wf, ((0, Np - N), (0, Kp - K)))          # (Np, Kp)

    # Reciprocal L2 norms (f32), computed in Pallas.
    x_inv = _inv_row_norms(xp, tm)                        # (Mp, 1)
    w_inv = _inv_row_norms(wp, tn).reshape(1, Np)         # (1, Np)

    # bf16 MXU operands; accumulation / epilogue stay f32.
    x_bf = xp.astype(jnp.bfloat16)
    w_bf = wp.astype(jnp.bfloat16)

    lbl = jnp.pad(label.astype(jnp.int32).reshape(M, 1), ((0, Mp - M), (0, 0)))
    col_ids = jnp.arange(Np, dtype=jnp.int32).reshape(1, Np)   # absolute class index

    nk = Kp // tk
    grid = (Mp // tm, Np // tn, nk)
    kern = partial(_arc_margin_kernel,
                   cos_m=math.cos(m), sin_m=math.sin(m),
                   th=math.cos(math.pi - m), mm=math.sin(math.pi - m) * m,
                   s=float(s), easy_margin=bool(easy_margin), nk=nk)

    cost = pl.CostEstimate(
        flops=2 * Mp * Np * Kp,
        transcendentals=0,
        bytes_accessed=(Mp * Kp + Np * Kp) * 2 + Mp * Np * 4)

    out = pl.pallas_call(
        kern,
        out_shape=jax.ShapeDtypeStruct((Mp, Np), jnp.float32),
        grid_spec=pltpu.PrefetchScalarGridSpec(
            num_scalar_prefetch=0, grid=grid,
            in_specs=[
                pl.BlockSpec((tm, tk), lambda i, j, k: (i, k)),   # x
                pl.BlockSpec((tn, tk), lambda i, j, k: (j, k)),   # weight (row-major)
                pl.BlockSpec((tm, 1), lambda i, j, k: (i, 0)),    # 1/||x||
                pl.BlockSpec((1, tn), lambda i, j, k: (0, j)),    # 1/||w||
                pl.BlockSpec((tm, 1), lambda i, j, k: (i, 0)),    # label
                pl.BlockSpec((1, tn), lambda i, j, k: (0, j)),    # class column index
            ],
            out_specs=pl.BlockSpec((tm, tn), lambda i, j, k: (i, j)),
            scratch_shapes=[pltpu.VMEM((tm, tn), jnp.float32)]),
        compiler_params=pltpu.CompilerParams(
            dimension_semantics=("parallel", "parallel", "arbitrary")),
        cost_estimate=cost,
    )(x_bf, w_bf, x_inv, w_inv, lbl, col_ids)

    return out[:M, :N]


# ------------------------------ reference -----------------------------------

def arc_margin_reference(x, weight, label, *, s=30.0, m=0.5, easy_margin=False):
    """Pure-JAX reference matching the kernel's bf16-operand / f32-accumulate math."""
    xf = x.astype(jnp.float32)
    wf = weight.astype(jnp.float32)
    x_inv = 1.0 / jnp.maximum(jnp.linalg.norm(xf, axis=1, keepdims=True), 1e-12)
    w_inv = 1.0 / jnp.maximum(jnp.linalg.norm(wf, axis=1, keepdims=True), 1e-12)
    xd = xf.astype(jnp.bfloat16).astype(jnp.float32)
    wd = wf.astype(jnp.bfloat16).astype(jnp.float32)
    cosine = jnp.dot(xd, wd.T, precision=jax.lax.Precision.HIGHEST) * x_inv * w_inv.T
    cosine = jnp.clip(cosine, -1.0, 1.0)
    sine = jnp.sqrt(1.0 - cosine * cosine + 1e-7)
    phi = cosine * math.cos(m) - sine * math.sin(m)
    if easy_margin:
        phi = jnp.where(cosine > 0.0, phi, cosine)
    else:
        phi = jnp.where(cosine > math.cos(math.pi - m), phi,
                        cosine - math.sin(math.pi - m) * m)
    one_hot = jax.nn.one_hot(label, weight.shape[0], dtype=jnp.float32)
    # NOTE: the original PyTorch code has a typo (`return outputd`); we return `output`.
    return (one_hot * phi + (1.0 - one_hot) * cosine) * s


# --------------------------------- main --------------------------------------

if __name__ == "__main__":
    key = jax.random.PRNGKey(0)
    kx, kw, kl = jax.random.split(key, 3)

    B, in_features, out_features = 16, 256, 300
    x = jax.random.normal(kx, (B, in_features), jnp.float32)
    # xavier_uniform_ init: U(-a, a), a = sqrt(6 / (fan_in + fan_out))
    a = math.sqrt(6.0 / (in_features + out_features))
    weight = jax.random.uniform(kw, (out_features, in_features), jnp.float32, -a, a)
    label = jax.random.randint(kl, (B,), 0, out_features, dtype=jnp.int32)

    # Small explicit tiles so the run exercises multiple M / N tiles and >1 K step
    # (accumulator init + epilogue paths). Production sizes use the defaults.
    out = arc_margin_product(x, weight, label, s=30.0, m=0.5, easy_margin=False,
                             tm=8, tn=128, tk=128)
    out = jax.block_until_ready(out)

    assert out.shape == (B, out_features) and out.dtype == jnp.float32
    assert bool(jnp.all(jnp.isfinite(out)))

    ref = arc_margin_reference(x, weight, label, s=30.0, m=0.5, easy_margin=False)
    max_err = float(jnp.max(jnp.abs(out - ref)))
    assert max_err < 5e-2, f"max abs err vs reference: {max_err}"

    print("KERNEL_OK")
</pallas_src>

<mosaic_0001>
module attributes {stable_mosaic.version = 11 : i64} {
  func.func @_inv_norm_kernel(%arg0: i32, %arg1: memref<8x256xf32, #tpu.memory_space<vmem>>, %arg2: memref<8x1xf32, #tpu.memory_space<vmem>>) attributes {dimension_semantics = [#tpu.dimension_semantics<parallel>], iteration_bounds = array<i64: 2>, scalar_prefetch = 0 : i64, scratch_operands = 0 : i64, tpu.core_type = #tpu.core_type<tc>, window_params = [{transform_indices = @transform_0, window_bounds = array<i64: 8, 256>}, {transform_indices = @transform_1, window_bounds = array<i64: 8, 1>}]} {
    %c0 = arith.constant 0 : index
    %c0_0 = arith.constant 0 : index
    %0 = vector.load %arg1[%c0, %c0_0] : memref<8x256xf32, #tpu.memory_space<vmem>>, vector<8x256xf32>
    %1 = arith.mulf %0, %0 : vector<8x256xf32>
    %cst = arith.constant dense<0.000000e+00> : vector<8xf32>
    %2 = vector.multi_reduction <add>, %1, %cst [1] : vector<8x256xf32> to vector<8xf32>
    %3 = vector.shape_cast %2 : vector<8xf32> to vector<8x1xf32>
    %4 = math.sqrt %3 : vector<8x1xf32>
    %cst_1 = arith.constant 9.99999996E-13 : f32
    %5 = vector.broadcast %cst_1 : f32 to vector<8x1xf32>
    %6 = arith.maximumf %4, %5 : vector<8x1xf32>
    %cst_2 = arith.constant 1.000000e+00 : f32
    %7 = vector.broadcast %cst_2 : f32 to vector<8x1xf32>
    %8 = arith.divf %7, %6 : vector<8x1xf32>
    %c0_3 = arith.constant 0 : index
    %c0_4 = arith.constant 0 : index
    %9 = vector.load %arg2[%c0_3, %c0_4] : memref<8x1xf32, #tpu.memory_space<vmem>>, vector<8x1xf32>
    tpu.vector_store %arg2[%c0_3, %c0_4], %8 {strides = array<i32>} : memref<8x1xf32, #tpu.memory_space<vmem>>, vector<8x1xf32>,
    return
  }
  func.func @transform_0(%arg0: i32) -> (i32, i32) {
    %c0_i32 = arith.constant 0 : i32
    %c0_i32_0 = arith.constant 0 : i32
    return %arg0, %c0_i32 : i32, i32
  }
  func.func @transform_1(%arg0: i32) -> (i32, i32) {
    %c0_i32 = arith.constant 0 : i32
    %c0_i32_0 = arith.constant 0 : i32
    return %arg0, %c0_i32 : i32, i32
  }
}

</mosaic_0001>

<llo_original>
// kernel: tpu_custom_call.1
$region0: #{tpu_custom_call.1}
  #allocation0 [shape = 'u32[]', space=smem, size = 0x4, offset = 0x4, fixed_abs, tag = 'smem constant byte address 0x4 - core index']
  #allocation1 [shape = 'u32[144,128]{1,0:T(1,128)}', space=vmem, size = 0x12000, scoped, tag = 'internal scratch']
  %s0 = inlined_call_operand.hbm [shape: f32[16,256], index: 0, kind: input, shape index: {}]
  %s1 = inlined_call_operand.vmem [shape: f32[16,1], index: 1, kind: output, shape index: {}]
  %s2 = sld [smem:[#allocation0]]
  $region41: #{tpu_custom_call.1} parent=0
    _
  %s4 = ssub.s32 1, %s2
  %s5 = scalar_select 0, %s4, %s2
  $region1: #{tpu_custom_call.1} parent=0
    #allocation2 [shape = 'u8[16384]{0}', space=vmem, size = 0x4000, scoped, tag = 'input window, operand 0']
    #allocation3 [shape = 's32[2]{0}', space=sflag, size = 0x8, scoped, tag = 'scoped memory for tpu_custom_call.1']
    %6 = vsyncpa [#allocation3], 0
    %s7 = scalar_lea.sflag [#allocation3], 1
    %8 = vsyncpa %s7, 0
    loop: start=0, step=1, limit=4
    $region2: #{tpu_custom_call.1} parent=1 // loop_pre_header
      _
    $region3: #{tpu_custom_call.1} parent=1 // loop_header
      %s10 = sphi 0, %s14
      %p11 = scmp.ge.s32.totalorder %s10, 4
      %s20 = sphi 0, %s22
      %s23 = sphi 0, %s20
      %s24 = sphi 0, %s23
      %s40 = sphi 0, %s24
      %s46 = sphi 0, %s48
      %s49 = sphi 0, %s46
      %s50 = sphi 0, %s49
      %s66 = sphi 0, %s50
    $region4: #{tpu_custom_call.1} parent=1 // loop_header_branch
      %13 = sbr.rel (%p11) target = $region8
    $region5: #{tpu_custom_call.1} parent=1 // loop_body
      %s15 = ssub.s32 %s10, 1
      %s16 = ssub.s32 %s10, 2
      %s17 = sadd.s32 %s10, 1
      %s18 = ssub.s32 %s10, %s17
      %p19 = scmp.eq.s32.totalorder %s18, 0
      %s21 = sadd.s32 %s20, 1
      %s22 = scalar_select %p19, %s20, %s21
      %p25 = pneg %p19
      %p26 = scmp.eq.s32.totalorder %s10, 1
      %p27 = por %p25, %p26
      %p28 = scmp.ne.s32.totalorder %s20, %s23
      %p29 = scmp.eq.s32.totalorder %s10, 0
      %p30 = por %p28, %p29
      %p31 = scmp.ne.s32.totalorder %s20, %s23
      %p32 = scmp.eq.s32.totalorder %s15, 1
      %p33 = por %p31, %p32
      %p34 = scmp.ne.s32.totalorder %s23, %s24
      %p35 = scmp.eq.s32.totalorder %s15, 0
      %p36 = por %p34, %p35
      %p37 = scmp.ne.s32.totalorder %s23, %s24
      %p38 = scmp.eq.s32.totalorder %s16, 1
      %p39 = por %p37, %p38
      %p41 = scmp.ne.s32.totalorder %s24, %s40
      %p42 = scmp.eq.s32.totalorder %s16, 0
      %p43 = por %p41, %p42
      %s44 = ssub.s32 %s10, %s17
      %p45 = scmp.eq.s32.totalorder %s44, 0
      %s47 = sadd.s32 %s46, 1
      %s48 = scalar_select %p45, %s46, %s47
      %p51 = pneg %p45
      %p52 = scmp.eq.s32.totalorder %s10, 1
      %p53 = por %p51, %p52
      %p54 = scmp.ne.s32.totalorder %s46, %s49
      %p55 = scmp.eq.s32.totalorder %s10, 0
      %p56 = por %p54, %p55
      %p57 = scmp.ne.s32.totalorder %s46, %s49
      %p58 = scmp.eq.s32.totalorder %s15, 1
      %p59 = por %p57, %p58
      %p60 = scmp.ne.s32.totalorder %s49, %s50
      %p61 = scmp.eq.s32.totalorder %s15, 0
      %p62 = por %p60, %p61
      %p63 = scmp.ne.s32.totalorder %s49, %s50
      %p64 = scmp.eq.s32.totalorder %s16, 1
      %p65 = por %p63, %p64
      %p67 = scmp.ne.s32.totalorder %s50, %s66
      %p68 = scmp.eq.s32.totalorder %s16, 0
      %p69 = por %p67, %p68
      %p70 = scmp.le.s32.totalorder 1, %s10
      %p71 = scmp.lt.s32.totalorder %s10, 3
      %p72 = pnand %p70, %p71
      %p73 = pneg %p72
      // Predicated region
      $region9: #{tpu_custom_call.1} parent=5 // pred_check
        _
      $region10: #{tpu_custom_call.1} parent=5 // pred_check_branch
        %75 = sbr.rel (%p72) target = $region12
      $region11: #{tpu_custom_call.1} parent=5 // pred_region
        %s76 = ssub.s32 %s10, 1
      $region12: #{tpu_custom_call.1} parent=5 // pred_fallthru
        _
      %p77 = scmp.lt.s32.totalorder %s10, 2
      // Predicated region
      $region13: #{tpu_custom_call.1} parent=5 // pred_check
        %p78 = pneg %p77
      $region14: #{tpu_custom_call.1} parent=5 // pred_check_branch
        %80 = sbr.rel (%p78) target = $region16
      $region15: #{tpu_custom_call.1} parent=5 // pred_region
        // Predicated region
        $region17: #{tpu_custom_call.1} parent=15 // pred_check
          %p81 = pneg %p30
        $region18: #{tpu_custom_call.1} parent=15 // pred_check_branch
          %83 = sbr.rel (%p81) target = $region20
        $region19: #{tpu_custom_call.1} parent=15 // pred_region
          %s84 = sand.u32 %s20, 1
          %s85 = scalar_lea.sflag [#allocation3], %s84
          %s86 = sand.u32 %s20, 1
          %s87 = smul.addr %s86, 16
          %s88 = scalar_lea.vmem [#allocation2], %s87
          %s90 = ssub.s32 256, 256
          %91 = vsyncadd %s85, %s90
          %s92 = smul.addr %s10, 2
          %s93 = smul.addr %s92, 128
          %s94 = scalar_lea.hbm %s0, %s93
          %s96 = sshll.u32 %s88, 4
          %s97 = int_to_ptr.vmem [resolvable:$true] %s96
          %99 = dma.hbm_to_vmem [thread:$0]  %s94, 256, %s97, %s85
        $region20: #{tpu_custom_call.1} parent=15 // pred_fallthru
          _
      $region16: #{tpu_custom_call.1} parent=5 // pred_fallthru
        _
      %p100 = scmp.le.s32.totalorder 1, %s10
      %p101 = scmp.lt.s32.totalorder %s10, 3
      %p102 = pnand %p100, %p101
      %p103 = pneg %p102
      // Predicated region
      $region21: #{tpu_custom_call.1} parent=5 // pred_check
        _
      $region22: #{tpu_custom_call.1} parent=5 // pred_check_branch
        %105 = sbr.rel (%p102) target = $region24
      $region23: #{tpu_custom_call.1} parent=5 // pred_region
        %s106 = ssub.s32 %s10, 1
        %s107 = sand.u32 %s23, 1
        %s108 = scalar_lea.sflag [#allocation3], %s107
        %s109 = sand.u32 %s23, 1
        %s110 = smul.addr %s109, 16
        %s111 = scalar_lea.vmem [#allocation2], %s110
        // Predicated region
        $region25: #{tpu_custom_call.1} parent=23 // pred_check
          %p112 = pneg %p36
        $region26: #{tpu_custom_call.1} parent=23 // pred_check_branch
          %114 = sbr.rel (%p112) target = $region28
        $region27: #{tpu_custom_call.1} parent=23 // pred_region
          %115 = dma.done %s108, 256
        $region28: #{tpu_custom_call.1} parent=23 // pred_fallthru
          _
        %s116 = sand.u32 %s23, 1
        %s117 = scalar_lea.sflag [#allocation3], %s116
        %s118 = sand.u32 %s23, 1
        %s119 = smul.addr %s118, 16
        %s120 = scalar_lea.vmem [#allocation2], %s119
        %p121 = pneg %p36
        %p122 = pneg %p33
        %p123 = pneg %p62
        %p124 = pneg %p59
        %p125 = scmp.lt.s32.totalorder %s15, 1
        %s126 = scalar_select %p125, %s15, 1
        %s127 = smul.addr %s126, 8
        %s128 = scalar_lea.vmem %s1, %s127
        %p129 = scmp.lt.s32.totalorder %s15, 1
        %s130 = scalar_select %p129, %s15, 1
        %s131 = smul.addr %s130, 8
        %s132 = scalar_lea.vmem %s1, %s131
        %v133 = vld [vmem:[%s111] sm:$0xff]
        %v134 = vld [vmem:[%s111 + $0x8] sm:$0xff]
        %v135 = vmul.f32 %v133, %v133
        %v136 = vmul.f32 %v134, %v134
        %v137 = vadd.f32 %v135, %v136
        %138 = vadd.xlane.f32.xlu0 %v137
        %v139 = vpop.xlane.xlu0 %138
        %v140 = vrsqrt.pop %v139
        %v141 = vmul.f32 %v139, %v140
        %vm142 = vcmp.eq.f32.partialorder %v139, inf
        %v143 = vsel %vm142, %v139, %v141
        %vm144 = vcmp.eq.f32.partialorder %v139, 0.0
        %v145 = vand.u32 %v139, 2147483648
        %v146 = vsel %vm144, %v145, %v143
        %v147 = vmax.f32 %v146, 1e-12
        %v148 = vrcp.pop %v147
        %v149 = vmul.f32 1.0, %v148
        %vm150 = vcmask 7168
        %151 = vst.msk [vmem:[%s132] sm:$0xff] %vm150, %v149
        %p152 = scmp.lt.s32.totalorder %s15, 1
        %s153 = scalar_select %p152, %s15, 1
        %s154 = smul.addr %s153, 8
        %s155 = scalar_lea.vmem %s1, %s154
        // Predicated region
        $region29: #{tpu_custom_call.1} parent=23 // pred_check
          %p156 = pneg %p59
        $region30: #{tpu_custom_call.1} parent=23 // pred_check_branch
          %158 = sbr.rel (%p156) target = $region32
        $region31: #{tpu_custom_call.1} parent=23 // pred_region
          _
        $region32: #{tpu_custom_call.1} parent=23 // pred_fallthru
          _
      $region24: #{tpu_custom_call.1} parent=5 // pred_fallthru
        _
      %p159 = scmp.le.s32.totalorder 2, %s10
      // Predicated region
      $region33: #{tpu_custom_call.1} parent=5 // pred_check
        %p160 = pneg %p159
      $region34: #{tpu_custom_call.1} parent=5 // pred_check_branch
        %162 = sbr.rel (%p160) target = $region36
      $region35: #{tpu_custom_call.1} parent=5 // pred_region
        %s163 = ssub.s32 %s10, 2
        // Predicated region
        $region37: #{tpu_custom_call.1} parent=35 // pred_check
          %p164 = pneg %p65
        $region38: #{tpu_custom_call.1} parent=35 // pred_check_branch
          %166 = sbr.rel (%p164) target = $region40
        $region39: #{tpu_custom_call.1} parent=35 // pred_region
          %p167 = scmp.lt.s32.totalorder %s16, 1
          %s168 = scalar_select %p167, %s16, 1
          %s169 = smul.addr %s168, 8
          %s170 = scalar_lea.vmem %s1, %s169
        $region40: #{tpu_custom_call.1} parent=35 // pred_fallthru
          _
      $region36: #{tpu_custom_call.1} parent=5 // pred_fallthru
        _
    $region6: #{tpu_custom_call.1} parent=1 // loop_footer
      %s14 = sadd.s32 1, %s10
    $region7: #{tpu_custom_call.1} parent=1 // loop_footer_branch
      %9 = sbr.rel target = $region3
    $region8: #{tpu_custom_call.1} parent=1 // loop_exit
      _
    %171 = vsyncpa [#allocation3], 1
    %s172 = scalar_lea.sflag [#allocation3], 1
    %173 = vsyncpa %s172, 1

</llo_original>
